<compile_context>
chip_gen: v7x
topology: tpu7x:2x2x1
jax: 0.10.0
libtpu: 0.0.40
codegen_flags: <defaults>
</compile_context>

<pallas_src>
import jax
import jax.numpy as jnp
from jax.experimental import pallas as pl
from jax.experimental.pallas import tpu as pltpu


def _round_up(x, m):
    return -(-x // m) * m


def _linear_kernel(x_ref, w_ref, b_ref, o_ref):
    """One batch tile: o[m, n] = sum_k x[m, k] * w[n, k] + b[n]."""
    x = x_ref[...]                       # [TM, IN]
    w = w_ref[...]                       # [OUT, IN]  (torch nn.Linear layout)
    b = b_ref[...]                       # [1, OUT]
    # Contract over in_features:  X @ W^T -> [TM, OUT].  Only the tiny
    # [OUT, IN] = [2, 10] weight needs any rearrangement to feed the MXU;
    # the big x tile is consumed as-is (no XLU transpose of (TM, IN)).
    y = jax.lax.dot_general(
        x, w,
        dimension_numbers=(((1,), (1,)), ((), ())),
        preferred_element_type=jnp.float32,
    )
    o_ref[...] = (y + b).astype(o_ref.dtype)


def _choose_tiling(batch, block_m, min_split_m):
    """Pick (tm, n_tiles, padded_batch) with minimal padding waste."""
    if batch < 2 * min_split_m:
        # Whole batch in a single tile: block dims equal the full array dims,
        # so the (8,128) divisibility rule doesn't apply and no pad is needed.
        return batch, 1, batch
    # Multi-tile path: pad only to the f32 sublane multiple (8), never to a
    # full block_m.  Force >=2 grid steps so v7x's two TensorCores both work.
    padded8 = _round_up(batch, 8)
    n_tiles = max(pl.cdiv(padded8, block_m), 2)
    tm = _round_up(pl.cdiv(padded8, n_tiles), 8)    # multiple of 8, <= block_m
    return tm, n_tiles, n_tiles * tm


def mock_model_forward(x, weight, bias, *, block_m=8192, min_split_m=2048):
    """Pallas equivalent of MockModel.forward (attention=False).

    Args:
      x:      [batch, 10] float32
      weight: [2, 10] float32  (torch layout: [out_features, in_features])
      bias:   [2] float32
    Returns:
      [batch, 2] float32
    """
    batch, in_f = x.shape
    out_f, _ = weight.shape

    tm, n_tiles, padded = _choose_tiling(batch, block_m, min_split_m)
    if padded != batch:
        x = jnp.pad(x, ((0, padded - batch), (0, 0)))

    b_row = bias.reshape(1, out_f)       # broadcasts over the batch (sublane) axis

    itemsize = jnp.dtype(x.dtype).itemsize
    cost = pl.CostEstimate(
        flops=2 * padded * in_f * out_f,
        transcendentals=0,
        bytes_accessed=(padded * in_f + out_f * in_f + out_f
                        + padded * out_f) * itemsize,
    )

    y = pl.pallas_call(
        _linear_kernel,
        out_shape=jax.ShapeDtypeStruct((padded, out_f), x.dtype),
        grid=(n_tiles,),
        in_specs=[
            pl.BlockSpec((tm, in_f), lambda i: (i, 0)),      # batch-tiled x
            pl.BlockSpec((out_f, in_f), lambda i: (0, 0)),   # resident weight
            pl.BlockSpec((1, out_f), lambda i: (0, 0)),      # resident bias
        ],
        out_specs=pl.BlockSpec((tm, out_f), lambda i: (i, 0)),
        compiler_params=pltpu.CompilerParams(
            dimension_semantics=("parallel",),
            vmem_limit_bytes=32 << 20,   # lane-padded 8K-row tiles x 2 bufs fit
        ),
        cost_estimate=cost,
    )(x, weight, b_row)

    return y[:batch] if padded != batch else y


if __name__ == "__main__":
    key = jax.random.PRNGKey(0)
    k_x, k_w, k_b = jax.random.split(key, 3)

    in_features, out_features = 10, 2

    # Deterministic "parameters" (synthetic init, not a checkpoint load).
    bound = 1.0 / (in_features ** 0.5)
    weight = jax.random.uniform(
        k_w, (out_features, in_features), jnp.float32, -bound, bound)
    bias = jax.random.uniform(
        k_b, (out_features,), jnp.float32, -bound, bound)

    # Small shape matching the module's forward (batch=8, features=10).
    batch = 8
    x = jax.random.normal(k_x, (batch, in_features), jnp.float32)

    y = jax.block_until_ready(mock_model_forward(x, weight, bias))
    y_ref = x @ weight.T + bias
    assert y.shape == (batch, out_features)
    assert jnp.allclose(y, y_ref, atol=1e-5, rtol=1e-5)

    # Exercise the multi-tile / 2-TC path with tiny blocks (exact fit: 3x200).
    batch2 = 600
    x2 = jax.random.normal(jax.random.PRNGKey(1), (batch2, in_features),
                           jnp.float32)
    y2 = jax.block_until_ready(
        mock_model_forward(x2, weight, bias, block_m=256, min_split_m=128))
    y2_ref = x2 @ weight.T + bias
    assert y2.shape == (batch2, out_features)
    assert jnp.allclose(y2, y2_ref, atol=1e-5, rtol=1e-5)

    # Exercise the ragged multi-tile path (pads only to the sublane multiple).
    batch3 = 601
    x3 = jax.random.normal(jax.random.PRNGKey(2), (batch3, in_features),
                           jnp.float32)
    y3 = jax.block_until_ready(
        mock_model_forward(x3, weight, bias, block_m=256, min_split_m=128))
    y3_ref = x3 @ weight.T + bias
    assert y3.shape == (batch3, out_features)
    assert jnp.allclose(y3, y3_ref, atol=1e-5, rtol=1e-5)

    print("KERNEL_OK")
</pallas_src>

<mosaic_0001>
module attributes {stable_mosaic.version = 11 : i64} {
  func.func @_linear_kernel(%arg0: i32, %arg1: memref<8x10xf32, #tpu.memory_space<vmem>>, %arg2: memref<2x10xf32, #tpu.memory_space<vmem>>, %arg3: memref<1x2xf32, #tpu.memory_space<vmem>>, %arg4: memref<8x2xf32, #tpu.memory_space<vmem>>) attributes {dimension_semantics = [#tpu.dimension_semantics<parallel>], iteration_bounds = array<i64: 1>, scalar_prefetch = 0 : i64, scratch_operands = 0 : i64, tpu.core_type = #tpu.core_type<tc>, window_params = [{transform_indices = @transform_0, window_bounds = array<i64: 8, 10>}, {pipeline_mode = #tpu.pipeline_mode<synchronous>, transform_indices = @transform_1, window_bounds = array<i64: 2, 10>}, {pipeline_mode = #tpu.pipeline_mode<synchronous>, transform_indices = @transform_2, window_bounds = array<i64: 1, 2>}, {transform_indices = @transform_3, window_bounds = array<i64: 8, 2>}]} {
    %c0 = arith.constant 0 : index
    %c0_0 = arith.constant 0 : index
    %0 = vector.load %arg1[%c0, %c0_0] : memref<8x10xf32, #tpu.memory_space<vmem>>, vector<8x10xf32>
    %c0_1 = arith.constant 0 : index
    %c0_2 = arith.constant 0 : index
    %1 = vector.load %arg2[%c0_1, %c0_2] : memref<2x10xf32, #tpu.memory_space<vmem>>, vector<2x10xf32>
    %c0_3 = arith.constant 0 : index
    %c0_4 = arith.constant 0 : index
    %2 = vector.load %arg3[%c0_3, %c0_4] : memref<1x2xf32, #tpu.memory_space<vmem>>, vector<1x2xf32>
    %cst = arith.constant dense<0.000000e+00> : vector<8x2xf32>
    %3 = tpu.matmul %0, %1, %cst {dimension_numbers = #tpu.dot_dimension_numbers<[1], [1], [0], [0], [0, 0, 1, 0], [], []>} : vector<8x10xf32>, vector<2x10xf32>, vector<8x2xf32> -> vector<8x2xf32>
    %4 = vector.broadcast %2 : vector<1x2xf32> to vector<8x2xf32>
    %5 = arith.addf %3, %4 : vector<8x2xf32>
    %c0_5 = arith.constant 0 : index
    %c0_6 = arith.constant 0 : index
    %6 = vector.load %arg4[%c0_5, %c0_6] : memref<8x2xf32, #tpu.memory_space<vmem>>, vector<8x2xf32>
    tpu.vector_store %arg4[%c0_5, %c0_6], %5 {strides = array<i32>} : memref<8x2xf32, #tpu.memory_space<vmem>>, vector<8x2xf32>,
    return
  }
  func.func @transform_0(%arg0: i32) -> (i32, i32) {
    %c0_i32 = arith.constant 0 : i32
    %c0_i32_0 = arith.constant 0 : i32
    return %arg0, %c0_i32 : i32, i32
  }
  func.func @transform_1(%arg0: i32) -> (i32, i32) {
    %c0_i32 = arith.constant 0 : i32
    %c0_i32_0 = arith.constant 0 : i32
    %c0_i32_1 = arith.constant 0 : i32
    return %c0_i32, %c0_i32_0 : i32, i32
  }
  func.func @transform_2(%arg0: i32) -> (i32, i32) {
    %c0_i32 = arith.constant 0 : i32
    %c0_i32_0 = arith.constant 0 : i32
    %c0_i32_1 = arith.constant 0 : i32
    return %c0_i32, %c0_i32_0 : i32, i32
  }
  func.func @transform_3(%arg0: i32) -> (i32, i32) {
    %c0_i32 = arith.constant 0 : i32
    %c0_i32_0 = arith.constant 0 : i32
    return %arg0, %c0_i32 : i32, i32
  }
}

</mosaic_0001>

<llo_original>
// kernel: tpu_custom_call.1
$region0: #{tpu_custom_call.1}
  #allocation0 [shape = 'u32[]', space=smem, size = 0x4, offset = 0x4, fixed_abs, tag = 'smem constant byte address 0x4 - core index']
  #allocation1 [shape = 'u32[144,128]{1,0:T(1,128)}', space=vmem, size = 0x12000, scoped, tag = 'internal scratch']
  %s0 = inlined_call_operand.hbm [shape: f32[8,10], index: 0, kind: input, shape index: {}]
  %s1 = inlined_call_operand.vmem [shape: f32[2,10], index: 1, kind: input, shape index: {}]
  %s2 = inlined_call_operand.vmem [shape: f32[1,2], index: 2, kind: input, shape index: {}]
  %s3 = inlined_call_operand.vmem [shape: f32[8,2], index: 3, kind: output, shape index: {}]
  %s4 = sld [smem:[#allocation0]]
  $region26: #{tpu_custom_call.1} parent=0
    _
  %s6 = ssub.s32 1, %s4
  %s7 = scalar_select 0, %s6, %s4
  $region1: #{tpu_custom_call.1} parent=0
    #allocation2 [shape = 'u8[4096]{0}', space=vmem, size = 0x1000, scoped, tag = 'input window, operand 0, single buffered']
    #allocation3 [shape = 's32[1]{0}', space=sflag, size = 0x4, scoped, tag = 'scoped memory for tpu_custom_call.1']
    %8 = vsyncpa [#allocation3], 0
    // Predicated region
    $region2: #{tpu_custom_call.1} parent=1 // pred_check
      _
    $region3: #{tpu_custom_call.1} parent=1 // pred_check_branch
      %10 = sbr.rel (0) target = $region5
    $region4: #{tpu_custom_call.1} parent=1 // pred_region
      %s12 = ssub.s32 128, 128
      %13 = vsyncadd [#allocation3], %s12
      %s15 = sshll.u32 [#allocation2], 4
      %s16 = int_to_ptr.vmem [resolvable:$true] %s15
      %18 = dma.hbm_to_vmem [thread:$0]  %s0, 128, %s16, [#allocation3]
    $region5: #{tpu_custom_call.1} parent=1 // pred_fallthru
      _
    // Predicated region
    $region6: #{tpu_custom_call.1} parent=1 // pred_check
      _
    $region7: #{tpu_custom_call.1} parent=1 // pred_check_branch
      %20 = sbr.rel (0) target = $region9
    $region8: #{tpu_custom_call.1} parent=1 // pred_region
      _
    $region9: #{tpu_custom_call.1} parent=1 // pred_fallthru
      _
    // Predicated region
    $region10: #{tpu_custom_call.1} parent=1 // pred_check
      _
    $region11: #{tpu_custom_call.1} parent=1 // pred_check_branch
      %22 = sbr.rel (0) target = $region13
    $region12: #{tpu_custom_call.1} parent=1 // pred_region
      _
    $region13: #{tpu_custom_call.1} parent=1 // pred_fallthru
      _
    // Predicated region
    $region14: #{tpu_custom_call.1} parent=1 // pred_check
      _
    $region15: #{tpu_custom_call.1} parent=1 // pred_check_branch
      %24 = sbr.rel (0) target = $region17
    $region16: #{tpu_custom_call.1} parent=1 // pred_region
      %25 = dma.done [#allocation3], 128
    $region17: #{tpu_custom_call.1} parent=1 // pred_fallthru
      _
    %v26 = vld [vmem:[#allocation2] sm:$0xff]
    %v27 = vld [vmem:[%s1] sm:$0x3]
    %v28 = vld [vmem:[%s2] sm:$0x1]
    %v30 = vlaneseq
    %v31 = vshrl.u32 %v30, 7
    %v32 = vsub.s32 0, %v31
    %v33 = vrot.slane %v28, %v32
    %vm35 = vcmask 80896
    %v37 = vsel %vm35, %v26, 0
    %v40 = vsel %vm35, %v27, 0
    %42 = vmatprep.subr.mxu0 0.0
    %43 = vmatpush1.xpose.msra.mxu0 %v40
    %44 = vmatprep.subr.mxu0 0.0
    %45 = vmatpush1.xpose.msra.mxu0 0.0
    %46 = vmatprep.subr.mxu0 0.0
    %47 = vmatpush1.xpose.msra.mxu0 0.0
    %48 = vmatprep.subr.mxu0 0.0
    %49 = vmatpush1.xpose.msra.mxu0 0.0
    %50 = vmatprep.subr.mxu0 0.0
    %51 = vmatpush1.xpose.msra.mxu0 0.0
    %52 = vmatprep.subr.mxu0 0.0
    %53 = vmatpush1.xpose.msra.mxu0 0.0
    %54 = vmatprep.subr.mxu0 0.0
    %55 = vmatpush1.xpose.msra.mxu0 0.0
    %56 = vmatprep.subr.mxu0 0.0
    %57 = vmatpush1.xpose.msra.mxu0 0.0
    %58 = vmatprep.subr.mxu0 0.0
    %59 = vmatpush1.xpose.msra.mxu0 0.0
    %60 = vmatprep.subr.mxu0 0.0
    %61 = vmatpush1.xpose.msra.mxu0 0.0
    %62 = vmatprep.subr.mxu0 0.0
    %63 = vmatpush1.xpose.msra.mxu0 0.0
    %64 = vmatprep.subr.mxu0 0.0
    %65 = vmatpush1.xpose.msra.mxu0 0.0
    %66 = vmatprep.subr.mxu0 0.0
    %67 = vmatpush1.xpose.msra.mxu0 0.0
    %68 = vmatprep.subr.mxu0 0.0
    %69 = vmatpush1.xpose.msra.mxu0 0.0
    %70 = vmatprep.subr.mxu0 0.0
    %71 = vmatpush1.xpose.msra.mxu0 0.0
    %72 = vmatprep.subr.mxu0 0.0
    %73 = vmatpush1.xpose.msra.mxu0 0.0
    %74 = vmatprep.subr.mxu0 0.0
    %75 = vmatpush1.xpose.msra.mxu0 0.0
    %76 = vmatprep.subr.mxu0 0.0
    %77 = vmatpush1.xpose.msra.mxu0 0.0
    %78 = vmatprep.subr.mxu0 0.0
    %79 = vmatpush1.xpose.msra.mxu0 0.0
    %80 = vmatprep.subr.mxu0 0.0
    %81 = vmatpush1.xpose.msra.mxu0 0.0
    %82 = vmatprep.subr.mxu0 0.0
    %83 = vmatpush1.xpose.msra.mxu0 0.0
    %84 = vmatprep.subr.mxu0 0.0
    %85 = vmatpush1.xpose.msra.mxu0 0.0
    %86 = vmatprep.subr.mxu0 0.0
    %87 = vmatpush1.xpose.msra.mxu0 0.0
    %88 = vmatprep.subr.mxu0 0.0
    %89 = vmatpush1.xpose.msra.mxu0 0.0
    %90 = vmatprep.subr.mxu0 0.0
    %91 = vmatpush1.xpose.msra.mxu0 0.0
    %92 = vmatprep.subr.mxu0 0.0
    %93 = vmatpush1.xpose.msra.mxu0 0.0
    %94 = vmatprep.subr.mxu0 0.0
    %95 = vmatpush1.xpose.msra.mxu0 0.0
    %96 = vmatprep.subr.mxu0 0.0
    %97 = vmatpush1.xpose.msra.mxu0 0.0
    %98 = vmatprep.subr.mxu0 0.0
    %99 = vmatpush1.xpose.msra.mxu0 0.0
    %100 = vmatprep.subr.mxu0 0.0
    %101 = vmatpush1.xpose.msra.mxu0 0.0
    %102 = vmatprep.subr.mxu0 0.0
    %103 = vmatpush1.xpose.msra.mxu0 0.0
    %104 = vmatprep.subr.mxu0 0.0
    %105 = vmatpush1.xpose.msra.mxu0 0.0
    %106 = vmatprep.mubr.f32.mxu0 0.0
    %107 = vmatmul.mubr.f32.gmra.mrb[0].mxu0 %v37
    %v108 = vpop.f32.mrb[0].mxu0
    %v109 = vadd.f32 %v33, %v108
    %v110 = vpop.f32.mrb[0].mxu0
    %111 = vdwg.mxu0
    %vm112 = vcmask 15360
    %113 = vst.msk [vmem:[%s3] sm:$0xff] %vm112, %v109
    // Predicated region
    $region18: #{tpu_custom_call.1} parent=1 // pred_check
      _
    $region19: #{tpu_custom_call.1} parent=1 // pred_check_branch
      %115 = sbr.rel (0) target = $region21
    $region20: #{tpu_custom_call.1} parent=1 // pred_region
      _
    $region21: #{tpu_custom_call.1} parent=1 // pred_fallthru
      _
    // Predicated region
    $region22: #{tpu_custom_call.1} parent=1 // pred_check
      _
    $region23: #{tpu_custom_call.1} parent=1 // pred_check_branch
      %117 = sbr.rel (0) target = $region25
    $region24: #{tpu_custom_call.1} parent=1 // pred_region
      _
    $region25: #{tpu_custom_call.1} parent=1 // pred_fallthru
      _
    %118 = vsyncpa [#allocation3], 1

</llo_original>
